<compile_context>
chip_gen: v5e
topology: v5e:2x2
jax: 0.10.0
libtpu: 0.0.40
codegen_flags: <defaults>
</compile_context>

<pallas_src>
from functools import partial

import numpy as np
import jax
import jax.numpy as jnp
from jax import lax
from jax.experimental import pallas as pl
from jax.experimental.pallas import tpu as pltpu

D = 128                            # projection size (biovil proj_size=128)
_VMEM_BUDGET = 24 * 1024 * 1024    # double-buffered working-set target; fits
                                   # the 32 MiB scoped default on v5e/v6e/v7x.


def _normalize(x, axis=-1, eps=1e-12):
    n = jnp.linalg.norm(x, axis=axis, keepdims=True)
    return x / jnp.maximum(n, eps)


def _softmax(x, axis):
    x = x - jnp.max(x, axis=axis, keepdims=True)
    e = jnp.exp(x)
    return e / jnp.sum(e, axis=axis, keepdims=True)


def _log_softmax(x, axis):
    s = x - jnp.max(x, axis=axis, keepdims=True)
    return s - jnp.log(jnp.sum(jnp.exp(s), axis=axis, keepdims=True))


def _lane_tile(hw, bytes_per_lane):
    """Largest lane tile (multiple of 128, or the full extent) whose
    (already double-buffered) working set fits the VMEM budget."""
    cands = [hw] + [t for t in (8192, 4096, 2048, 1024, 512, 256, 128)
                    if t < hw and hw % t == 0]
    for t in cands:
        if t * bytes_per_lane <= _VMEM_BUDGET:
            return t
    return cands[-1]


# ----------------------------------------------------------------------------
# Kernel 1a (patch-free path): per-sample spatial sum of the raw activations.
# ----------------------------------------------------------------------------
def xsum_kernel(x_ref, sum_ref):
    # x_ref:   (TB, Cin, tn) f32
    # sum_ref: (TB, 1, Cin)  f32   resident spatial-sum accumulator over j
    @pl.when(pl.program_id(1) == 0)
    def _init():
        sum_ref[...] = jnp.zeros_like(sum_ref)

    sum_ref[...] += jnp.sum(x_ref[...], axis=2)[:, None, :]


def spatial_sum(x):
    """Per-sample spatial sum of (B, Cin, HW) -> (B, Cin) f32 (Pallas)."""
    B, Cin, HW = x.shape
    tn = _lane_tile(HW, 2 * Cin * 4)          # double-buffered f32 input
    tb = 1
    if tn == HW:
        # HW fits in a single lane tile: block batch rows per step instead to
        # amortize the ~0.35 us/step pipeline overhead.
        for cand in range(B, 0, -1):
            if B % cand == 0 and 2 * cand * Cin * HW * 4 <= _VMEM_BUDGET:
                tb = cand
                break
    out = pl.pallas_call(
        xsum_kernel,
        out_shape=jax.ShapeDtypeStruct((B, 1, Cin), jnp.float32),
        grid_spec=pltpu.PrefetchScalarGridSpec(
            num_scalar_prefetch=0,
            grid=(B // tb, HW // tn),
            in_specs=[pl.BlockSpec((tb, Cin, tn), lambda b, j: (b, 0, j))],
            out_specs=pl.BlockSpec((tb, 1, Cin), lambda b, j: (b, 0, 0))),
        compiler_params=pltpu.CompilerParams(
            dimension_semantics=("parallel", "arbitrary")),
    )(x)
    return out[:, 0, :]


# ----------------------------------------------------------------------------
# Kernel 1b (two-pass path, Cin > 2*D): 1x1-conv projection in NCHW with the
# spatial-sum fused, bf16 patch output, in-kernel x cast.
# ----------------------------------------------------------------------------
def proj_conv1x1_kernel(x_ref, w_ref, patch_ref, psum_ref):
    # x_ref:     (1, Cin, tn) f32    (bf16 cast happens in-kernel: no wrapper
    #                                 convert round trip through HBM)
    # w_ref:     (D, Cin)     bf16
    # patch_ref: (1, D, tn)   bf16   (bf16 halves the dominant HBM stream)
    # psum_ref:  (1, 1, D)    f32    resident spatial-sum accumulator over j
    y = lax.dot_general(w_ref[...], x_ref[0].astype(jnp.bfloat16),
                        (((1,), (0,)), ((), ())),
                        preferred_element_type=jnp.float32)       # MXU (D, tn)
    patch_ref[0] = y.astype(patch_ref.dtype)

    @pl.when(pl.program_id(1) == 0)
    def _init():
        psum_ref[...] = jnp.zeros_like(psum_ref)

    psum_ref[...] += jnp.sum(y, axis=1)[None, None, :]


def image_projection(x, w_bf16):
    """(B, Cin, HW) f32 -> patch (B, D, HW) bf16 + spatial sum (B, D) f32."""
    B, Cin, HW = x.shape
    tn = _lane_tile(HW, 2 * (Cin * 4 + D * 2))
    patch, psum = pl.pallas_call(
        proj_conv1x1_kernel,
        out_shape=(jax.ShapeDtypeStruct((B, D, HW), jnp.bfloat16),
                   jax.ShapeDtypeStruct((B, 1, D), jnp.float32)),
        grid_spec=pltpu.PrefetchScalarGridSpec(
            num_scalar_prefetch=0,
            grid=(B, HW // tn),
            in_specs=[pl.BlockSpec((1, Cin, tn), lambda b, j: (b, 0, j)),
                      pl.BlockSpec((D, Cin), lambda b, j: (0, 0))],
            out_specs=[pl.BlockSpec((1, D, tn), lambda b, j: (b, 0, j)),
                       pl.BlockSpec((1, 1, D), lambda b, j: (b, 0, 0))]),
        compiler_params=pltpu.CompilerParams(
            dimension_semantics=("parallel", "arbitrary")),
    )(x, w_bf16)
    return patch, psum[:, 0, :]


# ----------------------------------------------------------------------------
# Kernel 2: per-pair GradCAM + SmoothL1 + consistency partials.
# ----------------------------------------------------------------------------
def pair_loss_kernel(feat_org_ref, feat_syn_ref, vec_org_ref, vec_syn_ref,
                     out_ref, *, k):
    # feat_*: (TP, C, HW)   bf16/f32  feature maps (bf16 patch embeddings, or
    #                                  raw x with the conv weight folded into vec)
    # vec_*:  (TP, 1, C)    f32       GradCAM channel weights (already /D [, @W])
    # out:    (TP, 1, 128)  f32       lane 0 = SmoothL1 mean, lane 1 = consistency
    TP, C, HW = feat_org_ref.shape

    def gradcam(vec_ref, feat_ref):
        f = feat_ref[...].astype(jnp.float32)
        # Batched (1, C) @ (C, HW) mat-vec per pair, f32 accumulation.
        gc = jnp.einsum('pzc,pcw->pzw', vec_ref[...], f,
                        preferred_element_type=jnp.float32)[:, 0, :]  # (TP, HW)
        gc = jnp.maximum(gc, 0.0)                                     # clamp(0)
        gc = gc - jnp.min(gc, axis=1, keepdims=True)                  # -= min
        # Exact divide on purpose: gc feeds a hard threshold (>= k).
        return gc / (jnp.max(gc, axis=1, keepdims=True) + 1e-7)

    org = gradcam(vec_org_ref, feat_org_ref)
    syn = gradcam(vec_syn_ref, feat_syn_ref)

    # SmoothL1 (beta=1, reduction='none'), mean over HW, per pair.
    d = org - syn
    ad = jnp.abs(d)
    sl1 = jnp.where(ad < 1.0, 0.5 * d * d, ad - 0.5)
    sim = jnp.sum(sl1, axis=1, keepdims=True) * (1.0 / HW)            # (TP, 1)

    # Consistency loss, per pair.
    mask = ((org + syn) >= k).astype(jnp.float32)
    roi_org = org * mask
    roi_syn = syn * mask
    denom = jnp.sum(mask, axis=1, keepdims=True) + 1e-7
    m_org = jnp.sum(roi_org, axis=1, keepdims=True) / denom
    m_syn = jnp.sum(roi_syn, axis=1, keepdims=True) / denom

    def std_unbiased(v):  # torch.std default: unbiased (N-1)
        mu = jnp.sum(v, axis=1, keepdims=True) * (1.0 / HW)
        return jnp.sqrt(jnp.sum((v - mu) ** 2, axis=1, keepdims=True)
                        * (1.0 / (HW - 1)))

    cst = (std_unbiased(roi_org) + std_unbiased(roi_syn)
           + jnp.maximum(k / 2 - m_org, 0.0)
           + jnp.maximum(k / 2 - m_syn, 0.0))                          # (TP, 1)

    lane = lax.broadcasted_iota(jnp.int32, out_ref.shape, 2)
    out_ref[...] = jnp.where(lane == 0, sim[:, :, None],
                             jnp.where(lane == 1, cst[:, :, None], 0.0))


def pair_losses(feat, vec3, k, half):
    """Per org/syn pair partial losses -> (half, 1, 128) f32 (lanes 0/1 used)."""
    B, C, HW = feat.shape
    fbytes = jnp.dtype(feat.dtype).itemsize
    # Pairs per grid step: fill vreg sublanes for the elementwise loss math,
    # but keep >= 2 grid steps when possible so megacore (v7x) can split work.
    tp = 1
    for cand in range(min(8, half), 0, -1):
        if half % cand:
            continue
        if half >= 2 and half // cand < 2:
            continue
        if 2 * 2 * cand * C * HW * fbytes <= _VMEM_BUDGET:
            tp = cand
            break
    off = half // tp   # block offset of the "syn" half along the batch axis
    kern = partial(pair_loss_kernel, k=k)
    return pl.pallas_call(
        kern,
        out_shape=jax.ShapeDtypeStruct((half, 1, 128), jnp.float32),
        grid_spec=pltpu.PrefetchScalarGridSpec(
            num_scalar_prefetch=0,
            grid=(half // tp,),
            in_specs=[pl.BlockSpec((tp, C, HW), lambda p: (p, 0, 0)),
                      pl.BlockSpec((tp, C, HW), lambda p: (p + off, 0, 0)),
                      pl.BlockSpec((tp, 1, C), lambda p: (p, 0, 0)),
                      pl.BlockSpec((tp, 1, C), lambda p: (p + off, 0, 0))],
            out_specs=pl.BlockSpec((tp, 1, 128), lambda p: (p, 0, 0))),
        compiler_params=pltpu.CompilerParams(
            dimension_semantics=("parallel",)),
    )(feat, feat, vec3, vec3)


# ----------------------------------------------------------------------------
# Kernel 3: SoftCLIP + final reduction (tiny, single grid step).
# ----------------------------------------------------------------------------
def combine_kernel(text_ref, gnorm_ref, imglab_ref, txtlab_ref, part_ref,
                   out_ref, *, w_con, w_sim, w_cst):
    B = text_ref.shape[0]
    half = part_ref.shape[0]
    output = lax.dot_general(text_ref[...], gnorm_ref[...],
                             (((1,), (1,)), ((), ())),
                             preferred_element_type=jnp.float32)      # (B, B)
    label_sim = lax.dot_general(txtlab_ref[...], imglab_ref[...],
                                (((1,), (1,)), ((), ())),
                                preferred_element_type=jnp.float32)   # (B, B)
    # SoftCLIP; the transposed branch is equivalent to axis-0 softmaxes.
    img_loss = -jnp.sum(_softmax(label_sim, 1) * _log_softmax(output, 1)) / B
    txt_loss = -jnp.sum(_softmax(label_sim, 0) * _log_softmax(output, 0)) / B
    loss_con = 0.5 * (img_loss + txt_loss)

    part = part_ref[...]                                              # (half,1,128)
    lane = lax.broadcasted_iota(jnp.int32, part.shape, 2)
    loss_sim = jnp.sum(jnp.where(lane == 0, part, 0.0)) * (1.0 / half)
    loss_cst = jnp.sum(jnp.where(lane == 1, part, 0.0)) * (1.0 / half)

    out_ref[0] = w_con * loss_con + w_sim * loss_sim + w_cst * loss_cst
    out_ref[1] = loss_con
    out_ref[2] = loss_sim
    out_ref[3] = loss_cst


def combine_losses(text_emb, g_norm, img_label, txt_label, partials,
                   w_con, w_sim, w_cst):
    B, Dp = text_emb.shape
    L = img_label.shape[1]
    half = partials.shape[0]
    kern = partial(combine_kernel, w_con=w_con, w_sim=w_sim, w_cst=w_cst)
    return pl.pallas_call(
        kern,
        out_shape=jax.ShapeDtypeStruct((4,), jnp.float32),
        grid_spec=pltpu.PrefetchScalarGridSpec(
            num_scalar_prefetch=0,
            grid=(1,),
            in_specs=[pl.BlockSpec((B, Dp), lambda i: (0, 0)),
                      pl.BlockSpec((B, Dp), lambda i: (0, 0)),
                      pl.BlockSpec((B, L), lambda i: (0, 0)),
                      pl.BlockSpec((B, L), lambda i: (0, 0)),
                      pl.BlockSpec((half, 1, 128), lambda i: (0, 0, 0))],
            out_specs=pl.BlockSpec((4,), lambda i: (0,),
                                   memory_space=pltpu.MemorySpace.SMEM)),
        compiler_params=pltpu.CompilerParams(
            dimension_semantics=("arbitrary",)),
    )(text_emb, g_norm, img_label, txt_label, partials)


# ----------------------------------------------------------------------------
# Wrapper mirroring SelfEQ.forward
# ----------------------------------------------------------------------------
class SelfEQPallas:
    def __init__(self, w_con=1.0, w_sim=1.0, w_cst=1.0, k=0.8,
                 cin=4, tdim=32, seed=0):
        self.k, self.w_con, self.w_sim, self.w_cst = k, w_con, w_sim, w_cst
        key = jax.random.PRNGKey(seed)
        k1, k2 = jax.random.split(key)
        # TODO(synk): synthetic encoder weights stand in for the pretrained models.
        self.w_img = 0.1 * jax.random.normal(k1, (D, cin), jnp.float32)  # 1x1 conv
        self.w_txt = 0.1 * jax.random.normal(k2, (tdim, D), jnp.float32)
        # Patch-free GradCAM path when Cin <= 2*D: the (B, D, HW) patch tensor
        # is never written to HBM (W folded into the GradCAM channel weights,
        # raw activations streamed instead).  For Cin > 2*D a bf16 patch
        # tensor two-pass is cheaper.
        self.fused = cin <= 2 * D

    def text_embeddings(self, tokens):
        return _normalize(tokens @ self.w_txt, axis=1)                 # (B, D)

    def forward(self, img_tensor, tokens, img_label, txt_label):
        B, Cin, H, W = img_tensor.shape
        assert B % 2 == 0, "SelfEQ pairs org/syn samples: batch must be even"
        half = B // 2
        HW = H * W
        x = img_tensor.reshape(B, Cin, HW)      # free metadata reshape (NCHW)

        text_emb = self.text_embeddings(tokens)

        if self.fused:
            sum_x = spatial_sum(x)                              # Pallas, (B, Cin)
            g = (sum_x @ self.w_img.T) * (1.0 / HW)             # tiny (B, D)
            feat = x                                            # stream raw x
        else:
            patch, gsum = image_projection(x, self.w_img.astype(jnp.bfloat16))
            g = gsum * (1.0 / HW)
            feat = patch                                        # (B, D, HW) bf16

        g_norm = _normalize(g, axis=1)

        # Closed-form gradient of sum(diag(text_emb @ g_norm.T)) wrt the patch
        # embeddings, spatially averaged (== autograd grad .mean((2,3))); the
        # gradient is constant over HW so no (B, D, HW) gradient tensor is
        # ever materialized:  grad_mean_b = (t_b - (t_b.g^_b) g^_b) / (||g_b|| HW)
        nrm = jnp.maximum(jnp.linalg.norm(g, axis=1, keepdims=True), 1e-12)
        tdotg = jnp.sum(text_emb * g_norm, axis=1, keepdims=True)
        grad_mean = (text_emb - tdotg * g_norm) / (nrm * HW)    # (B, D)

        if self.fused:
            vec = (grad_mean @ self.w_img) * (1.0 / D)          # fold W, (B, Cin)
        else:
            vec = grad_mean * (1.0 / D)                         # (B, D)
        vec3 = vec[:, None, :]

        partials = pair_losses(feat, vec3, self.k, half)
        losses = combine_losses(text_emb, g_norm, img_label, txt_label,
                                partials, self.w_con, self.w_sim, self.w_cst)
        if self.w_cst == 0:   # mirror the torch branch: report loss_cst = 0
            losses = losses.at[3].set(0.0)
        return losses         # [loss, loss_con, loss_sim, loss_cst]


# ----------------------------------------------------------------------------
# Pure-JAX reference (same math, XLA ops, no Pallas) for the sanity check.
# ----------------------------------------------------------------------------
def reference_losses(model, img_tensor, tokens, img_label, txt_label,
                     use_autodiff_grad=False):
    B, Cin, H, W = img_tensor.shape
    HW = H * W
    half = B // 2
    x = img_tensor.reshape(B, Cin, HW)
    text_emb = model.text_embeddings(tokens)

    if model.fused:
        patch = jnp.einsum('dc,bcp->bdp', model.w_img, x)              # f32
        cam_feat = patch
    else:
        patch = jnp.einsum('dc,bcp->bdp', model.w_img.astype(jnp.bfloat16),
                           x.astype(jnp.bfloat16),
                           preferred_element_type=jnp.float32)
        cam_feat = patch.astype(jnp.bfloat16).astype(jnp.float32)      # stored bf16

    g = jnp.mean(patch, axis=2)
    g_norm = _normalize(g, axis=1)

    if use_autodiff_grad:
        def diag_sum(p):
            m = jnp.mean(p, axis=2)
            gg = m / jnp.maximum(jnp.linalg.norm(m, axis=1, keepdims=True), 1e-12)
            return jnp.sum(text_emb * gg)
        grad_mean = jnp.mean(jax.grad(diag_sum)(patch), axis=2)
    else:
        nrm = jnp.maximum(jnp.linalg.norm(g, axis=1, keepdims=True), 1e-12)
        tdotg = jnp.sum(text_emb * g_norm, axis=1, keepdims=True)
        grad_mean = (text_emb - tdotg * g_norm) / (nrm * HW)

    output = text_emb @ g_norm.T
    label_sim = txt_label @ img_label.T
    img_loss = -jnp.sum(jax.nn.softmax(label_sim, 1)
                        * jax.nn.log_softmax(output, 1)) / B
    txt_loss = -jnp.sum(jax.nn.softmax(label_sim.T, 1)
                        * jax.nn.log_softmax(output.T, 1)) / B
    loss_con = 0.5 * (img_loss + txt_loss)

    gc = jnp.einsum('bdp,bd->bp', cam_feat, grad_mean) / D
    gc = jnp.maximum(gc, 0.0)
    gc = gc - jnp.min(gc, axis=1, keepdims=True)
    gc = gc / (jnp.max(gc, axis=1, keepdims=True) + 1e-7)
    org, syn = gc[:half], gc[half:]

    d = org - syn
    ad = jnp.abs(d)
    sl1 = jnp.where(ad < 1.0, 0.5 * d * d, ad - 0.5)
    loss_sim = jnp.mean(jnp.mean(sl1, axis=-1))

    mask = ((org + syn) >= model.k).astype(jnp.float32)
    roi_org, roi_syn = org * mask, syn * mask
    denom = jnp.sum(mask, -1) + 1e-7
    m_org = jnp.sum(roi_org, -1) / denom
    m_syn = jnp.sum(roi_syn, -1) / denom
    std = lambda v: jnp.sqrt(jnp.sum((v - jnp.mean(v, -1, keepdims=True)) ** 2, -1)
                             / (HW - 1))
    loss_cst = jnp.mean(std(roi_org) + std(roi_syn)
                        + jnp.maximum(model.k / 2 - m_org, 0.0)
                        + jnp.maximum(model.k / 2 - m_syn, 0.0))
    loss = (model.w_con * loss_con + model.w_sim * loss_sim
            + model.w_cst * loss_cst)
    return jnp.stack([loss, loss_con, loss_sim, loss_cst])


def _run_case(B, Cin, H, W, Tdim, L, tol):
    key = jax.random.PRNGKey(0)
    k1, k2, k3, k4 = jax.random.split(key, 4)
    img_tensor = jax.random.normal(k1, (B, Cin, H, W), jnp.float32)
    tokens = jax.random.normal(k2, (B, Tdim), jnp.float32)
    img_label = _normalize(jax.random.normal(k3, (B, L), jnp.float32), axis=1)
    txt_label = _normalize(jax.random.normal(k4, (B, L), jnp.float32), axis=1)

    model = SelfEQPallas(w_con=1.0, w_sim=1.0, w_cst=1.0, k=0.8,
                         cin=Cin, tdim=Tdim, seed=0)
    losses = jax.block_until_ready(
        model.forward(img_tensor, tokens, img_label, txt_label))

    ref = reference_losses(model, img_tensor, tokens, img_label, txt_label,
                           use_autodiff_grad=model.fused)
    np.testing.assert_allclose(np.asarray(losses), np.asarray(ref),
                               rtol=tol, atol=tol)
    return losses


if __name__ == "__main__":
    # Primary case: small Cin -> patch-free (fused) GradCAM path, TP=2 pairs
    # per loss-kernel step, megacore-parallel pair grid.
    _run_case(B=8, Cin=4, H=16, W=16, Tdim=32, L=128, tol=2e-3)
    # Secondary case: Cin > 2*D -> two-pass path with a bf16 patch tensor.
    _run_case(B=2, Cin=320, H=8, W=8, Tdim=32, L=128, tol=2e-3)
    print("KERNEL_OK")
</pallas_src>

<mosaic_0001>
module attributes {stable_mosaic.version = 11 : i64} {
  func.func @xsum_kernel(%arg0: i32, %arg1: i32, %arg2: memref<8x4x256xf32, #tpu.memory_space<vmem>>, %arg3: memref<8x1x4xf32, #tpu.memory_space<vmem>>) attributes {dimension_semantics = [#tpu.dimension_semantics<parallel>, #tpu.dimension_semantics<arbitrary>], iteration_bounds = array<i64: 1, 1>, scalar_prefetch = 0 : i64, scratch_operands = 0 : i64, tpu.core_type = #tpu.core_type<tc>, window_params = [{transform_indices = @transform_0, window_bounds = array<i64: 8, 4, 256>}, {transform_indices = @transform_1, window_bounds = array<i64: 8, 1, 4>}]} {
    %c0_i32 = arith.constant 0 : i32
    %0 = arith.cmpi eq, %arg1, %c0_i32 : i32
    %1 = arith.extui %0 : i1 to i32
    %c0_i32_0 = arith.constant 0 : i32
    %2 = arith.cmpi ne, %1, %c0_i32_0 : i32
    scf.if %2 {
      %cst_9 = arith.constant 0.000000e+00 : f32
      %9 = vector.broadcast %cst_9 : f32 to vector<8x1x4xf32>
      %c0_10 = arith.constant 0 : index
      %c0_11 = arith.constant 0 : index
      %c0_12 = arith.constant 0 : index
      %10 = vector.load %arg3[%c0_10, %c0_11, %c0_12] : memref<8x1x4xf32, #tpu.memory_space<vmem>>, vector<8x1x4xf32>
      tpu.vector_store %arg3[%c0_10, %c0_11, %c0_12], %9 {strides = array<i32>} : memref<8x1x4xf32, #tpu.memory_space<vmem>>, vector<8x1x4xf32>,
    } else {
    }
    %c0 = arith.constant 0 : index
    %c0_1 = arith.constant 0 : index
    %c0_2 = arith.constant 0 : index
    %3 = vector.load %arg3[%c0, %c0_1, %c0_2] : memref<8x1x4xf32, #tpu.memory_space<vmem>>, vector<8x1x4xf32>
    %c0_3 = arith.constant 0 : index
    %c0_4 = arith.constant 0 : index
    %c0_5 = arith.constant 0 : index
    %4 = vector.load %arg2[%c0_3, %c0_4, %c0_5] : memref<8x4x256xf32, #tpu.memory_space<vmem>>, vector<8x4x256xf32>
    %cst = arith.constant dense<0.000000e+00> : vector<8x4xf32>
    %5 = vector.multi_reduction <add>, %4, %cst [2] : vector<8x4x256xf32> to vector<8x4xf32>
    %6 = vector.shape_cast %5 : vector<8x4xf32> to vector<8x1x4xf32>
    %7 = arith.addf %3, %6 : vector<8x1x4xf32>
    %c0_6 = arith.constant 0 : index
    %c0_7 = arith.constant 0 : index
    %c0_8 = arith.constant 0 : index
    %8 = vector.load %arg3[%c0_6, %c0_7, %c0_8] : memref<8x1x4xf32, #tpu.memory_space<vmem>>, vector<8x1x4xf32>
    tpu.vector_store %arg3[%c0_6, %c0_7, %c0_8], %7 {strides = array<i32>} : memref<8x1x4xf32, #tpu.memory_space<vmem>>, vector<8x1x4xf32>,
    return
  }
  func.func @transform_0(%arg0: i32, %arg1: i32) -> (i32, i32, i32) {
    %c0_i32 = arith.constant 0 : i32
    %c0_i32_0 = arith.constant 0 : i32
    return %arg0, %c0_i32, %arg1 : i32, i32, i32
  }
  func.func @transform_1(%arg0: i32, %arg1: i32) -> (i32, i32, i32) {
    %c0_i32 = arith.constant 0 : i32
    %c0_i32_0 = arith.constant 0 : i32
    %c0_i32_1 = arith.constant 0 : i32
    return %arg0, %c0_i32, %c0_i32_0 : i32, i32, i32
  }
}

</mosaic_0001>

<llo_original>
// kernel: tpu_custom_call.1
$region0: #{tpu_custom_call.1}
  #allocation0 [shape = 'u32[]', space=smem, size = 0x4, offset = 0x4, fixed_abs, tag = 'smem constant byte address 0x4 - core index']
  #allocation1 [shape = 'u32[72,128]{1,0:T(1,128)}', space=vmem, size = 0x9000, scoped, tag = 'internal scratch']
  %s0 = inlined_call_operand.hbm [shape: f32[8,4,256], index: 0, kind: input, shape index: {}]
  %s1 = inlined_call_operand.vmem [shape: f32[8,1,4], index: 1, kind: output, shape index: {}]
  %s2 = sld [smem:[#allocation0]]
  $region22: #{tpu_custom_call.1} parent=0
    _
  %s4 = ssub.s32 1, %s2
  %s5 = scalar_select 0, %s4, %s2
  $region1: #{tpu_custom_call.1} parent=0
    #allocation2 [shape = 'u8[32768]{0}', space=vmem, size = 0x8000, scoped, tag = 'input window, operand 0, single buffered']
    #allocation3 [shape = 's32[1]{0}', space=sflag, size = 0x4, scoped, tag = 'scoped memory for tpu_custom_call.1']
    %6 = vsyncpa [#allocation3], 0
    // Predicated region
    $region2: #{tpu_custom_call.1} parent=1 // pred_check
      _
    $region3: #{tpu_custom_call.1} parent=1 // pred_check_branch
      %8 = sbr.rel (0) target = $region5
    $region4: #{tpu_custom_call.1} parent=1 // pred_region
      %10 = vsyncadd [#allocation3], 0
      %s11 = sshll.u32 %s0, 4
      %s12 = int_to_ptr.hbm [resolvable:$true] %s11
      %s13 = sshll.u32 [#allocation2], 4
      %s14 = int_to_ptr.vmem [resolvable:$true] %s13
      %19 = dma.hbm_to_vmem [thread:$0]  %s12, 1024, %s14, [#allocation3], 128, 128, 8
    $region5: #{tpu_custom_call.1} parent=1 // pred_fallthru
      _
    // Predicated region
    $region6: #{tpu_custom_call.1} parent=1 // pred_check
      _
    $region7: #{tpu_custom_call.1} parent=1 // pred_check_branch
      %21 = sbr.rel (0) target = $region9
    $region8: #{tpu_custom_call.1} parent=1 // pred_region
      %23 = dma.done [#allocation3], 1024
    $region9: #{tpu_custom_call.1} parent=1 // pred_fallthru
      _
    %p24 = scmp.eq.s32.totalorder 0, 0
    // Predicated region
    $region10: #{tpu_custom_call.1} parent=1 // pred_check
      %p25 = pneg %p24
    $region11: #{tpu_custom_call.1} parent=1 // pred_check_branch
      %27 = sbr.rel (%p25) target = $region13
    $region12: #{tpu_custom_call.1} parent=1 // pred_region
      %vm28 = vcmask 24576
      %29 = vst.msk [vmem:[%s1] sm:$0x1] %vm28, 0.0
      %30 = vst.msk [vmem:[%s1 + $0x1] sm:$0x1] %vm28, 0.0
      %31 = vst.msk [vmem:[%s1 + $0x2] sm:$0x1] %vm28, 0.0
      %32 = vst.msk [vmem:[%s1 + $0x3] sm:$0x1] %vm28, 0.0
      %33 = vst.msk [vmem:[%s1 + $0x4] sm:$0x1] %vm28, 0.0
      %34 = vst.msk [vmem:[%s1 + $0x5] sm:$0x1] %vm28, 0.0
      %35 = vst.msk [vmem:[%s1 + $0x6] sm:$0x1] %vm28, 0.0
      %36 = vst.msk [vmem:[%s1 + $0x7] sm:$0x1] %vm28, 0.0
    $region13: #{tpu_custom_call.1} parent=1 // pred_fallthru
      _
    %v37 = vld [vmem:[%s1] sm:$0x1]
    %v38 = vld [vmem:[%s1 + $0x1] sm:$0x1]
    %v39 = vld [vmem:[%s1 + $0x2] sm:$0x1]
    %v40 = vld [vmem:[%s1 + $0x3] sm:$0x1]
    %v41 = vld [vmem:[%s1 + $0x4] sm:$0x1]
    %v42 = vld [vmem:[%s1 + $0x5] sm:$0x1]
    %v43 = vld [vmem:[%s1 + $0x6] sm:$0x1]
    %v44 = vld [vmem:[%s1 + $0x7] sm:$0x1]
    %v45 = vld [vmem:[#allocation2] sm:$0xff]
    %v46 = vld [vmem:[#allocation2 + $0x8] sm:$0xff]
    %v47 = vld [vmem:[#allocation2 + $0x10] sm:$0xff]
    %v48 = vld [vmem:[#allocation2 + $0x18] sm:$0xff]
    %v49 = vld [vmem:[#allocation2 + $0x20] sm:$0xff]
    %v50 = vld [vmem:[#allocation2 + $0x28] sm:$0xff]
    %v51 = vld [vmem:[#allocation2 + $0x30] sm:$0xff]
    %v52 = vld [vmem:[#allocation2 + $0x38] sm:$0xff]
    %61 = vst [vmem:[#allocation1] ss:$2 sm:$0xff] %v45
    %v62 = vld.sshfl [vmem:[#allocation1] sm:$0xff pattern:$0x75316420]
    %v63 = vld.sshfl [vmem:[#allocation1 + $0x8] sm:$0xff pattern:$0x75316420]
    %s64 = scalar_lea.vmem [#allocation1], 16
    %65 = vst [vmem:[%s64] ss:$2 sm:$0xff] %v46
    %v66 = vld.sshfl [vmem:[#allocation1 + $0x10] sm:$0xff pattern:$0x75316420]
    %v67 = vld.sshfl [vmem:[#allocation1 + $0x18] sm:$0xff pattern:$0x75316420]
    %s68 = scalar_lea.vmem [#allocation1], 32
    %69 = vst [vmem:[%s68] ss:$2 sm:$0xff] %v47
    %v70 = vld.sshfl [vmem:[#allocation1 + $0x20] sm:$0xff pattern:$0x75316420]
    %v71 = vld.sshfl [vmem:[#allocation1 + $0x28] sm:$0xff pattern:$0x75316420]
    %s72 = scalar_lea.vmem [#allocation1], 48
    %73 = vst [vmem:[%s72] ss:$2 sm:$0xff] %v48
    %v74 = vld.sshfl [vmem:[#allocation1 + $0x30] sm:$0xff pattern:$0x75316420]
    %v75 = vld.sshfl [vmem:[#allocation1 + $0x38] sm:$0xff pattern:$0x75316420]
    %76 = vst [vmem:[#allocation1] ss:$2 sm:$0xff] %v49
    %v77 = vld.sshfl [vmem:[#allocation1] sm:$0xff pattern:$0x75316420]
    %v78 = vld.sshfl [vmem:[#allocation1 + $0x8] sm:$0xff pattern:$0x75316420]
    %79 = vst [vmem:[%s64] ss:$2 sm:$0xff] %v50
    %v80 = vld.sshfl [vmem:[#allocation1 + $0x10] sm:$0xff pattern:$0x75316420]
    %v81 = vld.sshfl [vmem:[#allocation1 + $0x18] sm:$0xff pattern:$0x75316420]
    %82 = vst [vmem:[%s68] ss:$2 sm:$0xff] %v51
    %v83 = vld.sshfl [vmem:[#allocation1 + $0x20] sm:$0xff pattern:$0x75316420]
    %v84 = vld.sshfl [vmem:[#allocation1 + $0x28] sm:$0xff pattern:$0x75316420]
    %85 = vst [vmem:[%s72] ss:$2 sm:$0xff] %v52
    %v86 = vld.sshfl [vmem:[#allocation1 + $0x30] sm:$0xff pattern:$0x75316420]
    %v87 = vld.sshfl [vmem:[#allocation1 + $0x38] sm:$0xff pattern:$0x75316420]
    %vm104 = vcmask 1043456
    %v105 = vsel %vm104, %v62, 0.0
    %v106 = vsel %vm104, %v63, 0.0
    %v107 = vadd.f32 %v105, %v106
    %108 = vadd.xlane.f32.xlu0 %v107
    %v109 = vpop.xlane.xlu0 %108
    %v110 = vsel %vm104, %v66, 0.0
    %v111 = vsel %vm104, %v67, 0.0
    %v112 = vadd.f32 %v110, %v111
    %113 = vadd.xlane.f32.xlu0 %v112
    %v114 = vpop.xlane.xlu0 %113
    %v115 = vsel %vm104, %v70, 0.0
    %v116 = vsel %vm104, %v71, 0.0
    %v117 = vadd.f32 %v115, %v116
    %118 = vadd.xlane.f32.xlu0 %v117
    %v119 = vpop.xlane.xlu0 %118
    %v120 = vsel %vm104, %v74, 0.0
    %v121 = vsel %vm104, %v75, 0.0
    %v122 = vadd.f32 %v120, %v121
    %123 = vadd.xlane.f32.xlu0 %v122
    %v124 = vpop.xlane.xlu0 %123
    %v125 = vsel %vm104, %v77, 0.0
    %v126 = vsel %vm104, %v78, 0.0
    %v127 = vadd.f32 %v125, %v126
    %128 = vadd.xlane.f32.xlu0 %v127
    %v129 = vpop.xlane.xlu0 %128
    %v130 = vsel %vm104, %v80, 0.0
    %v131 = vsel %vm104, %v81, 0.0
    %v132 = vadd.f32 %v130, %v131
    %133 = vadd.xlane.f32.xlu0 %v132
    %v134 = vpop.xlane.xlu0 %133
    %v135 = vsel %vm104, %v83, 0.0
    %v136 = vsel %vm104, %v84, 0.0
    %v137 = vadd.f32 %v135, %v136
    %138 = vadd.xlane.f32.xlu0 %v137
    %v139 = vpop.xlane.xlu0 %138
    %v140 = vsel %vm104, %v86, 0.0
    %v141 = vsel %vm104, %v87, 0.0
    %v142 = vadd.f32 %v140, %v141
    %143 = vadd.xlane.f32.xlu0 %v142
    %v144 = vpop.xlane.xlu0 %143
    %v153 = vperm.slane %v109, 0
    %v154 = vperm.slane %v109, 1
    %v155 = vperm.slane %v109, 2
    %v156 = vperm.slane %v109, 3
    %v157 = vperm.slane %v114, 0
    %v158 = vperm.slane %v114, 1
    %v159 = vperm.slane %v114, 2
    %v160 = vperm.slane %v114, 3
    %v161 = vperm.slane %v119, 0
    %v162 = vperm.slane %v119, 1
    %v163 = vperm.slane %v119, 2
    %v164 = vperm.slane %v119, 3
    %v165 = vperm.slane %v124, 0
    %v166 = vperm.slane %v124, 1
    %v167 = vperm.slane %v124, 2
    %v168 = vperm.slane %v124, 3
    %v169 = vperm.slane %v129, 0
    %v170 = vperm.slane %v129, 1
    %v171 = vperm.slane %v129, 2
    %v172 = vperm.slane %v129, 3
    %v173 = vperm.slane %v134, 0
    %v174 = vperm.slane %v134, 1
    %v175 = vperm.slane %v134, 2
    %v176 = vperm.slane %v134, 3
    %v177 = vperm.slane %v139, 0
    %v178 = vperm.slane %v139, 1
    %v179 = vperm.slane %v139, 2
    %v180 = vperm.slane %v139, 3
    %v181 = vperm.slane %v144, 0
    %v182 = vperm.slane %v144, 1
    %v183 = vperm.slane %v144, 2
    %v184 = vperm.slane %v144, 3
    %185 = vst [vmem:[#allocation1] ss:$9 sm:$0xff] %v153
    %s186 = scalar_lea.vmem [#allocation1], 1
    %187 = vst [vmem:[%s186] ss:$9 sm:$0xff] %v154
    %s188 = scalar_lea.vmem [#allocation1], 2
    %189 = vst [vmem:[%s188] ss:$9 sm:$0xff] %v155
    %s190 = scalar_lea.vmem [#allocation1], 3
    %191 = vst [vmem:[%s190] ss:$9 sm:$0xff] %v156
    %v192 = vld [vmem:[#allocation1] sm:$0xff]
    %193 = vst [vmem:[#allocation1] ss:$9 sm:$0xff] %v157
    %194 = vst [vmem:[%s186] ss:$9 sm:$0xff] %v158
    %195 = vst [vmem:[%s188] ss:$9 sm:$0xff] %v159
    %196 = vst [vmem:[%s190] ss:$9 sm:$0xff] %v160
    %v197 = vld [vmem:[#allocation1] sm:$0xff]
    %198 = vst [vmem:[#allocation1] ss:$9 sm:$0xff] %v161
    %199 = vst [vmem:[%s186] ss:$9 sm:$0xff] %v162
    %200 = vst [vmem:[%s188] ss:$9 sm:$0xff] %v163
    %201 = vst [vmem:[%s190] ss:$9 sm:$0xff] %v164
    %v202 = vld [vmem:[#allocation1] sm:$0xff]
    %203 = vst [vmem:[#allocation1] ss:$9 sm:$0xff] %v165
    %204 = vst [vmem:[%s186] ss:$9 sm:$0xff] %v166
    %205 = vst [vmem:[%s188] ss:$9 sm:$0xff] %v167
    %206 = vst [vmem:[%s190] ss:$9 sm:$0xff] %v168
    %v207 = vld [vmem:[#allocation1] sm:$0xff]
    %208 = vst [vmem:[#allocation1] ss:$9 sm:$0xff] %v169
    %209 = vst [vmem:[%s186] ss:$9 sm:$0xff] %v170
    %210 = vst [vmem:[%s188] ss:$9 sm:$0xff] %v171
    %211 = vst [vmem:[%s190] ss:$9 sm:$0xff] %v172
    %v212 = vld [vmem:[#allocation1] sm:$0xff]
    %213 = vst [vmem:[#allocation1] ss:$9 sm:$0xff] %v173
    %214 = vst [vmem:[%s186] ss:$9 sm:$0xff] %v174
    %215 = vst [vmem:[%s188] ss:$9 sm:$0xff] %v175
    %216 = vst [vmem:[%s190] ss:$9 sm:$0xff] %v176
    %v217 = vld [vmem:[#allocation1] sm:$0xff]
    %218 = vst [vmem:[#allocation1] ss:$9 sm:$0xff] %v177
    %219 = vst [vmem:[%s186] ss:$9 sm:$0xff] %v178
    %220 = vst [vmem:[%s188] ss:$9 sm:$0xff] %v179
    %221 = vst [vmem:[%s190] ss:$9 sm:$0xff] %v180
    %v222 = vld [vmem:[#allocation1] sm:$0xff]
    %223 = vst [vmem:[#allocation1] ss:$9 sm:$0xff] %v181
    %224 = vst [vmem:[%s186] ss:$9 sm:$0xff] %v182
    %225 = vst [vmem:[%s188] ss:$9 sm:$0xff] %v183
    %226 = vst [vmem:[%s190] ss:$9 sm:$0xff] %v184
    %v227 = vld [vmem:[#allocation1] sm:$0xff]
    %228 = vset.pattern.permute.xlu0 0
    %229 = vperm.xlu0 %228, %v192
    %v230 = vpop.permute.xlu0 %229
    %231 = vset.pattern.permute.xlu0 0
    %232 = vperm.xlu0 %231, %v197
    %v233 = vpop.permute.xlu0 %232
    %234 = vset.pattern.permute.xlu0 0
    %235 = vperm.xlu0 %234, %v202
    %v236 = vpop.permute.xlu0 %235
    %237 = vset.pattern.permute.xlu0 0
    %238 = vperm.xlu0 %237, %v207
    %v239 = vpop.permute.xlu0 %238
    %240 = vset.pattern.permute.xlu0 0
    %241 = vperm.xlu0 %240, %v212
    %v242 = vpop.permute.xlu0 %241
    %243 = vset.pattern.permute.xlu0 0
    %244 = vperm.xlu0 %243, %v217
    %v245 = vpop.permute.xlu0 %244
    %246 = vset.pattern.permute.xlu0 0
    %247 = vperm.xlu0 %246, %v222
    %v248 = vpop.permute.xlu0 %247
    %249 = vset.pattern.permute.xlu0 0
    %250 = vperm.xlu0 %249, %v227
    %v251 = vpop.permute.xlu0 %250
    %v252 = vlaneseq
    %v253 = vand.u32 %v252, 127
    %v254 = vperm.slane %v230, %v253
    %v255 = vperm.slane %v233, %v253
    %v256 = vperm.slane %v236, %v253
    %v257 = vperm.slane %v239, %v253
    %v258 = vperm.slane %v242, %v253
    %v259 = vperm.slane %v245, %v253
    %v260 = vperm.slane %v248, %v253
    %v261 = vperm.slane %v251, %v253
    %v270 = vadd.f32 %v37, %v254
    %v271 = vadd.f32 %v38, %v255
    %v272 = vadd.f32 %v39, %v256
    %v273 = vadd.f32 %v40, %v257
    %v274 = vadd.f32 %v41, %v258
    %v275 = vadd.f32 %v42, %v259
    %v276 = vadd.f32 %v43, %v260
    %v277 = vadd.f32 %v44, %v261
    %vm278 = vcmask 24576
    %279 = vst.msk [vmem:[%s1] sm:$0x1] %vm278, %v270
    %280 = vst.msk [vmem:[%s1 + $0x1] sm:$0x1] %vm278, %v271
    %281 = vst.msk [vmem:[%s1 + $0x2] sm:$0x1] %vm278, %v272
    %282 = vst.msk [vmem:[%s1 + $0x3] sm:$0x1] %vm278, %v273
    %283 = vst.msk [vmem:[%s1 + $0x4] sm:$0x1] %vm278, %v274
    %284 = vst.msk [vmem:[%s1 + $0x5] sm:$0x1] %vm278, %v275
    %285 = vst.msk [vmem:[%s1 + $0x6] sm:$0x1] %vm278, %v276
    %286 = vst.msk [vmem:[%s1 + $0x7] sm:$0x1] %vm278, %v277
    // Predicated region
    $region14: #{tpu_custom_call.1} parent=1 // pred_check
      _
    $region15: #{tpu_custom_call.1} parent=1 // pred_check_branch
      %288 = sbr.rel (0) target = $region17
    $region16: #{tpu_custom_call.1} parent=1 // pred_region
      _
    $region17: #{tpu_custom_call.1} parent=1 // pred_fallthru
      _
    // Predicated region
    $region18: #{tpu_custom_call.1} parent=1 // pred_check
      _
    $region19: #{tpu_custom_call.1} parent=1 // pred_check_branch
      %290 = sbr.rel (0) target = $region21
    $region20: #{tpu_custom_call.1} parent=1 // pred_region
      _
    $region21: #{tpu_custom_call.1} parent=1 // pred_fallthru
      _
    %291 = vsyncpa [#allocation3], 1

</llo_original>
